<compile_context>
chip_gen: v7x
topology: tpu7x:2x2x1
jax: 0.10.0
libtpu: 0.0.40
codegen_flags: <defaults>
</compile_context>

<pallas_src>
import functools

import jax
import jax.numpy as jnp
import numpy as np
from jax.experimental import pallas as pl
from jax.experimental.pallas import tpu as pltpu

EPS = 1e-3  # BatchNorm1d(eps=0.001); momentum only affects running stats, not fwd output.


def _round_up(x, m):
    return ((x + m - 1) // m) * m


def _cdiv(a, b):
    return (a + b - 1) // b


def _vmem_capacity_bytes():
    """Physical VMEM per core (generation aware); conservative v7x fallback."""
    try:
        cap = getattr(pltpu.get_tpu_info(), "vmem_capacity_bytes", None)
        if cap:
            return int(cap)
    except Exception:
        pass
    return 64 * 1024 * 1024


def _conv_stats_kernel(x_ref, w_ref, y_ref, sum_ref, ssq_ref, *, K, stride, tm,
                       n_half, n_l, L_out, T_real, use_relu):
    """Pass 1: fused conv (K accumulating bf16 MXU matmuls, f32 acc) + ReLU + stats.

    Writes the unnormalized activation tile (bf16) and accumulates per-channel
    sum / sum-of-squares (f32) into per-parallel-slice resident accumulators.
    """
    p = pl.program_id(0)   # size-2 "parallel" axis -> one stats partial per TC on v7x
    j = pl.program_id(1)   # "arbitrary" reduction axis over tiles

    @pl.when(j == 0)
    def _():
        sum_ref[...] = jnp.zeros_like(sum_ref)
        ssq_ref[...] = jnp.zeros_like(ssq_ref)

    def x_slice(k):
        if stride == 1:
            return x_ref[0, pl.ds(k, tm), :]
        # TODO(synk): strided sublane loads can lower less efficiently on some
        # generations; Tacotron's BatchNormConv1d always uses stride == 1.
        return x_ref[0, pl.ds(k, tm, stride=stride), :]

    acc = jnp.dot(x_slice(0), w_ref[0], preferred_element_type=jnp.float32)
    for k in range(1, K):
        acc = acc + jnp.dot(x_slice(k), w_ref[k], preferred_element_type=jnp.float32)
    if use_relu:
        acc = jnp.maximum(acc, 0.0)

    # Zero rows that are L_out / tile padding so the batch statistics are exact.
    t = p * n_half + j
    l0 = (t % n_l) * tm
    row = jax.lax.broadcasted_iota(jnp.int32, (tm, 1), 0)
    valid = jnp.logical_and(row + l0 < L_out, t < T_real)
    acc = jnp.where(valid, acc, 0.0)

    y_ref[...] = acc.astype(y_ref.dtype)                         # bf16 intermediate
    sum_ref[...] += jnp.sum(acc, axis=0, keepdims=True)[None]    # f32 stats
    ssq_ref[...] += jnp.sum(acc * acc, axis=0, keepdims=True)[None]


def _affine_transpose_kernel(y_ref, scale_ref, shift_ref, o_ref, *, C_out):
    """Pass 2: folded BN (one f32 FMA/elem) + in-kernel transpose to (C, L) layout."""
    y = y_ref[...].astype(jnp.float32)              # (tm, C_pad)
    o = y * scale_ref[...] + shift_ref[...]
    o_t = jnp.transpose(o, (1, 0))                  # (C_pad, tm): XLU, hidden under DMA
    o_ref[0] = o_t[:C_out, :]


def batchnorm_conv1d(x, weight, gamma, beta, *, stride, padding, activation="relu"):
    """x: (N, C_in, L) f32, weight: (C_out, C_in, K) f32, gamma/beta: (C_out,) f32.

    Returns (N, C_out, L_out) f32, matching PyTorch BatchNormConv1d.forward in
    training mode (batch statistics, biased variance, eps=1e-3).
    """
    N, C_in, L = x.shape
    C_out, C_in_w, K = weight.shape
    assert C_in_w == C_in
    L_out = (L + 2 * padding - K) // stride + 1
    assert L_out > 0

    C_in_pad = _round_up(C_in, 128)
    C_pad = _round_up(C_out, 128)

    # ---- generation-aware VMEM budget -> row-tile size ------------------------
    vmem = _vmem_capacity_bytes()
    vmem_limit = int((vmem * 3) // 4)
    vmem_budget = int((vmem * 9) // 16)
    # TODO(synk): pipeline_mode=pl.Buffered(1) on the constant weight spec would
    # drop one of these two buffers; we budget for both instead.
    w_bytes = 2 * K * C_in_pad * C_pad * 2
    # per output row: bf16 x tile (x2 buf) + bf16 y tile (x2 buf) + f32 accumulator
    per_row = 2 * stride * C_in_pad * 2 + 2 * C_pad * 2 + C_pad * 4
    tm_budget = min(max(16, (vmem_budget - w_bytes) // per_row), 4096)
    if L_out <= tm_budget:
        tm, n_l = _round_up(L_out, 16), 1
    else:
        tm = max(128, (tm_budget // 128) * 128)  # 128-multiple keeps Pass-2 lane-dense
        n_l = _cdiv(L_out, tm)

    TI = _round_up((tm - 1) * stride + K, 16)   # input rows per tile (body + halo)
    TB = tm * stride                            # input rows consumed per tile body
    T_real = N * n_l
    n_half = _cdiv(T_real, 2)                   # 2-way stats split (one slice per v7x TC)
    T_pad = 2 * n_half
    L_out_pad = n_l * tm
    M = N * L_out

    # ---- glue: transpose x once, conv-pad, cut halo'd tiles (bf16) ------------
    # TODO(synk): the small halo duplication could be removed entirely with
    # Element-indexed BlockSpecs or a manual-DMA pipeline over raw HBM x.
    L_tot = (n_l - 1) * TB + TI
    xt = jnp.transpose(x, (0, 2, 1)).astype(jnp.bfloat16)            # (N, L, C_in)
    right = L_tot - (L + padding)
    if right >= 0:
        xt = jnp.pad(xt, ((0, 0), (padding, right), (0, C_in_pad - C_in)))
    else:
        xt = jnp.pad(xt, ((0, 0), (padding, 0), (0, C_in_pad - C_in)))[:, :L_tot, :]
    if n_l == 1:
        x_tiles = xt
    else:
        x_tiles = jnp.stack([xt[:, j * TB: j * TB + TI, :] for j in range(n_l)], axis=1)
        x_tiles = x_tiles.reshape(N * n_l, TI, C_in_pad)
    x_tiles = x_tiles.reshape(T_real, TI, C_in_pad)
    if T_pad > T_real:
        x_tiles = jnp.pad(x_tiles, ((0, T_pad - T_real), (0, 0), (0, 0)))

    # Weight as (K, C_in_pad, C_pad) bf16, VMEM-resident in the kernel.
    w_mat = jnp.transpose(weight, (2, 1, 0))
    w_mat = jnp.pad(w_mat, ((0, 0), (0, C_in_pad - C_in), (0, C_pad - C_out)))
    w_mat = w_mat.astype(jnp.bfloat16)

    use_relu = activation == "relu"
    kern1 = functools.partial(
        _conv_stats_kernel, K=K, stride=stride, tm=tm, n_half=n_half, n_l=n_l,
        L_out=L_out, T_real=T_real, use_relu=use_relu)

    y, psum, pssq = pl.pallas_call(
        kern1,
        out_shape=(
            jax.ShapeDtypeStruct((T_pad * tm, C_pad), jnp.bfloat16),   # bf16 intermediate
            jax.ShapeDtypeStruct((2, 1, C_pad), jnp.float32),
            jax.ShapeDtypeStruct((2, 1, C_pad), jnp.float32),
        ),
        grid=(2, n_half),
        in_specs=[
            pl.BlockSpec((1, TI, C_in_pad), lambda p, j: (p * n_half + j, 0, 0)),
            pl.BlockSpec((K, C_in_pad, C_pad), lambda p, j: (0, 0, 0)),
        ],
        out_specs=(
            pl.BlockSpec((tm, C_pad), lambda p, j: (p * n_half + j, 0)),
            pl.BlockSpec((1, 1, C_pad), lambda p, j: (p, 0, 0)),
            pl.BlockSpec((1, 1, C_pad), lambda p, j: (p, 0, 0)),
        ),
        compiler_params=pltpu.CompilerParams(
            dimension_semantics=("parallel", "arbitrary"),
            vmem_limit_bytes=vmem_limit,
        ),
        cost_estimate=pl.CostEstimate(
            flops=2 * T_pad * tm * K * C_in_pad * C_pad,
            transcendentals=0,
            bytes_accessed=(x_tiles.size * 2 + w_mat.size * 2
                            + T_pad * tm * C_pad * 2 + 4 * C_pad * 4),
        ),
    )(x_tiles, w_mat)

    # ---- training-mode BN stats folded into one per-channel FMA ---------------
    # TODO(synk): single-pass E[y^2]-E[y]^2 can cancel for huge N*L_out; switch to
    # centered per-tile partials if that regime shows up.
    inv_m = 1.0 / float(M)
    mean = jnp.sum(psum, axis=0) * inv_m                 # (1, C_pad)
    var = jnp.maximum(jnp.sum(pssq, axis=0) * inv_m - mean * mean, 0.0)
    inv_std = jax.lax.rsqrt(var + EPS)
    scale = jnp.pad(gamma, (0, C_pad - C_out)).reshape(1, C_pad) * inv_std
    shift = jnp.pad(beta, (0, C_pad - C_out)).reshape(1, C_pad) - mean * scale

    kern2 = functools.partial(_affine_transpose_kernel, C_out=C_out)
    out_pad = pl.pallas_call(
        kern2,
        out_shape=jax.ShapeDtypeStruct((N, C_out, L_out_pad), jnp.float32),
        grid=(N, n_l),
        in_specs=[
            pl.BlockSpec((tm, C_pad), lambda n, j: (n * n_l + j, 0)),
            pl.BlockSpec((1, C_pad), lambda n, j: (0, 0)),
            pl.BlockSpec((1, C_pad), lambda n, j: (0, 0)),
        ],
        out_specs=pl.BlockSpec((1, C_out, tm), lambda n, j: (n, 0, j)),
        compiler_params=pltpu.CompilerParams(
            dimension_semantics=("parallel", "parallel"),  # both TCs on v7x
            vmem_limit_bytes=vmem_limit,
        ),
        cost_estimate=pl.CostEstimate(
            flops=2 * N * L_out_pad * C_pad,
            transcendentals=0,
            bytes_accessed=N * L_out_pad * (C_pad * 2 + C_out * 4) + 2 * C_pad * 4,
        ),
    )(y, scale, shift)

    if L_out_pad != L_out:
        out_pad = out_pad[:, :, :L_out]
    return out_pad


def _reference(x, weight, gamma, beta, *, stride, padding, activation="relu"):
    """Pure-JAX reference mirroring PyTorch semantics (training-mode BN).

    Conv inputs are cast to bf16 (f32 accumulation) to match the kernel's MXU
    precision; BN statistics and normalization math are f32.
    """
    y = jax.lax.conv_general_dilated(
        x.astype(jnp.bfloat16), weight.astype(jnp.bfloat16),
        window_strides=(stride,), padding=[(padding, padding)],
        dimension_numbers=("NCH", "OIH", "NCH"),
        preferred_element_type=jnp.float32,
    )
    if activation == "relu":
        y = jnp.maximum(y, 0.0)
    mean = jnp.mean(y, axis=(0, 2), keepdims=True)
    var = jnp.mean((y - mean) ** 2, axis=(0, 2), keepdims=True)
    return (y - mean) / jnp.sqrt(var + EPS) * gamma.reshape(1, -1, 1) + beta.reshape(
        1, -1, 1
    )


if __name__ == "__main__":
    # Deterministic parameters / inputs (synthetic; no checkpoint load).
    N, C_in, C_out, L = 2, 4, 8, 16
    K, stride, padding = 3, 1, 1

    key = jax.random.PRNGKey(0)
    kx, kw = jax.random.split(key)
    x = jax.random.normal(kx, (N, C_in, L), dtype=jnp.float32)
    # nn.Conv1d weight: (out_channels, in_channels, kernel_size), bias=False.
    weight = 0.1 * jax.random.normal(kw, (C_out, C_in, K), dtype=jnp.float32)
    # nn.BatchNorm1d default init: gamma = 1, beta = 0.
    gamma = jnp.ones((C_out,), dtype=jnp.float32)
    beta = jnp.zeros((C_out,), dtype=jnp.float32)

    out = batchnorm_conv1d(
        x, weight, gamma, beta, stride=stride, padding=padding, activation="relu"
    )
    out = jax.block_until_ready(out)

    ref = _reference(
        x, weight, gamma, beta, stride=stride, padding=padding, activation="relu"
    )
    assert out.shape == (N, C_out, (L + 2 * padding - K) // stride + 1)
    # The activation is stored as bf16 between the two passes (stats stay f32), so
    # allow a bf16-sized tolerance against the f32-intermediate reference.
    np.testing.assert_allclose(np.asarray(out), np.asarray(ref), atol=2e-2, rtol=2e-2)

    print("KERNEL_OK")
</pallas_src>

<mosaic_0001>
module attributes {stable_mosaic.version = 11 : i64} {
  func.func @_conv_stats_kernel(%arg0: i32, %arg1: i32, %arg2: memref<1x32x128xbf16, #tpu.memory_space<vmem>>, %arg3: memref<3x128x128xbf16, #tpu.memory_space<vmem>>, %arg4: memref<16x128xbf16, #tpu.memory_space<vmem>>, %arg5: memref<1x1x128xf32, #tpu.memory_space<vmem>>, %arg6: memref<1x1x128xf32, #tpu.memory_space<vmem>>) attributes {dimension_semantics = [#tpu.dimension_semantics<parallel>, #tpu.dimension_semantics<arbitrary>], iteration_bounds = array<i64: 2, 1>, scalar_prefetch = 0 : i64, scratch_operands = 0 : i64, tpu.core_type = #tpu.core_type<tc>, window_params = [{transform_indices = @transform_0, window_bounds = array<i64: 1, 32, 128>}, {pipeline_mode = #tpu.pipeline_mode<synchronous>, transform_indices = @transform_1, window_bounds = array<i64: 3, 128, 128>}, {transform_indices = @transform_2, window_bounds = array<i64: 16, 128>}, {transform_indices = @transform_3, window_bounds = array<i64: 1, 1, 128>}, {transform_indices = @transform_4, window_bounds = array<i64: 1, 1, 128>}]} {
    %c0_i32 = arith.constant 0 : i32
    %0 = arith.cmpi eq, %arg1, %c0_i32 : i32
    %1 = arith.extui %0 : i1 to i32
    %c0_i32_0 = arith.constant 0 : i32
    %2 = arith.cmpi ne, %1, %c0_i32_0 : i32
    scf.if %2 {
      %cst_43 = arith.constant 0.000000e+00 : f32
      %62 = vector.broadcast %cst_43 : f32 to vector<1x1x128xf32>
      %c0_44 = arith.constant 0 : index
      %c0_45 = arith.constant 0 : index
      %c0_46 = arith.constant 0 : index
      %63 = vector.load %arg5[%c0_44, %c0_45, %c0_46] : memref<1x1x128xf32, #tpu.memory_space<vmem>>, vector<1x1x128xf32>
      tpu.vector_store %arg5[%c0_44, %c0_45, %c0_46], %62 {strides = array<i32>} : memref<1x1x128xf32, #tpu.memory_space<vmem>>, vector<1x1x128xf32>,
      %cst_47 = arith.constant 0.000000e+00 : f32
      %64 = vector.broadcast %cst_47 : f32 to vector<1x1x128xf32>
      %c0_48 = arith.constant 0 : index
      %c0_49 = arith.constant 0 : index
      %c0_50 = arith.constant 0 : index
      %65 = vector.load %arg6[%c0_48, %c0_49, %c0_50] : memref<1x1x128xf32, #tpu.memory_space<vmem>>, vector<1x1x128xf32>
      tpu.vector_store %arg6[%c0_48, %c0_49, %c0_50], %64 {strides = array<i32>} : memref<1x1x128xf32, #tpu.memory_space<vmem>>, vector<1x1x128xf32>,
    } else {
    }
    %c0 = arith.constant 0 : index
    %c0_1 = arith.constant 0 : index
    %c0_2 = arith.constant 0 : index
    %3 = vector.load %arg2[%c0, %c0_1, %c0_2] : memref<1x32x128xbf16, #tpu.memory_space<vmem>>, vector<1x16x128xbf16>
    %4 = vector.shape_cast %3 : vector<1x16x128xbf16> to vector<16x128xbf16>
    %c0_3 = arith.constant 0 : index
    %c0_4 = arith.constant 0 : index
    %c0_5 = arith.constant 0 : index
    %5 = vector.load %arg3[%c0_3, %c0_4, %c0_5] : memref<3x128x128xbf16, #tpu.memory_space<vmem>>, vector<1x128x128xbf16>
    %6 = vector.shape_cast %5 : vector<1x128x128xbf16> to vector<128x128xbf16>
    %cst = arith.constant dense<0.000000e+00> : vector<16x128xf32>
    %7 = tpu.matmul %4, %6, %cst {dimension_numbers = #tpu.dot_dimension_numbers<[1], [0], [0], [1], [0, 0, 1, 1], [], []>} : vector<16x128xbf16>, vector<128x128xbf16>, vector<16x128xf32> -> vector<16x128xf32>
    %c0_6 = arith.constant 0 : index
    %c1 = arith.constant 1 : index
    %c0_7 = arith.constant 0 : index
    %8 = vector.load %arg2[%c0_6, %c1, %c0_7] : memref<1x32x128xbf16, #tpu.memory_space<vmem>>, vector<1x16x128xbf16>
    %9 = vector.shape_cast %8 : vector<1x16x128xbf16> to vector<16x128xbf16>
    %c1_8 = arith.constant 1 : index
    %c0_9 = arith.constant 0 : index
    %c0_10 = arith.constant 0 : index
    %10 = vector.load %arg3[%c1_8, %c0_9, %c0_10] : memref<3x128x128xbf16, #tpu.memory_space<vmem>>, vector<1x128x128xbf16>
    %11 = vector.shape_cast %10 : vector<1x128x128xbf16> to vector<128x128xbf16>
    %cst_11 = arith.constant dense<0.000000e+00> : vector<16x128xf32>
    %12 = tpu.matmul %9, %11, %cst_11 {dimension_numbers = #tpu.dot_dimension_numbers<[1], [0], [0], [1], [0, 0, 1, 1], [], []>} : vector<16x128xbf16>, vector<128x128xbf16>, vector<16x128xf32> -> vector<16x128xf32>
    %13 = arith.addf %7, %12 : vector<16x128xf32>
    %c0_12 = arith.constant 0 : index
    %c2 = arith.constant 2 : index
    %c0_13 = arith.constant 0 : index
    %14 = vector.load %arg2[%c0_12, %c2, %c0_13] : memref<1x32x128xbf16, #tpu.memory_space<vmem>>, vector<1x16x128xbf16>
    %15 = vector.shape_cast %14 : vector<1x16x128xbf16> to vector<16x128xbf16>
    %c2_14 = arith.constant 2 : index
    %c0_15 = arith.constant 0 : index
    %c0_16 = arith.constant 0 : index
    %16 = vector.load %arg3[%c2_14, %c0_15, %c0_16] : memref<3x128x128xbf16, #tpu.memory_space<vmem>>, vector<1x128x128xbf16>
    %17 = vector.shape_cast %16 : vector<1x128x128xbf16> to vector<128x128xbf16>
    %cst_17 = arith.constant dense<0.000000e+00> : vector<16x128xf32>
    %18 = tpu.matmul %15, %17, %cst_17 {dimension_numbers = #tpu.dot_dimension_numbers<[1], [0], [0], [1], [0, 0, 1, 1], [], []>} : vector<16x128xbf16>, vector<128x128xbf16>, vector<16x128xf32> -> vector<16x128xf32>
    %19 = arith.addf %13, %18 : vector<16x128xf32>
    %cst_18 = arith.constant 0.000000e+00 : f32
    %20 = vector.broadcast %cst_18 : f32 to vector<16x128xf32>
    %21 = arith.maximumf %19, %20 : vector<16x128xf32>
    %c1_i32 = arith.constant 1 : i32
    %22 = arith.muli %arg0, %c1_i32 : i32
    %23 = arith.addi %22, %arg1 : i32
    %c1_i32_19 = arith.constant 1 : i32
    %c0_i32_20 = arith.constant 0 : i32
    %24 = arith.cmpi eq, %c1_i32_19, %c0_i32_20 : i32
    %c1_i32_21 = arith.constant 1 : i32
    %25 = arith.select %24, %c1_i32_21, %c1_i32_19 : i32
    %26 = arith.remsi %23, %25 : i32
    %c0_i32_22 = arith.constant 0 : i32
    %27 = arith.cmpi ne, %26, %c0_i32_22 : i32
    %c0_i32_23 = arith.constant 0 : i32
    %28 = arith.cmpi slt, %26, %c0_i32_23 : i32
    %c0_i32_24 = arith.constant 0 : i32
    %29 = arith.cmpi slt, %25, %c0_i32_24 : i32
    %30 = arith.xori %28, %29 : i1
    %31 = arith.andi %30, %27 : i1
    %32 = arith.addi %26, %25 : i32
    %33 = arith.select %31, %32, %26 : i32
    %c16_i32 = arith.constant 16 : i32
    %34 = arith.muli %33, %c16_i32 : i32
    %35 = tpu.iota {dimensions = array<i32: 0>} : vector<16x1xi32>
    %36 = vector.broadcast %34 : i32 to vector<16x1xi32>
    %37 = arith.addi %35, %36 : vector<16x1xi32>
    %c16_i32_25 = arith.constant 16 : i32
    %38 = vector.broadcast %c16_i32_25 : i32 to vector<16x1xi32>
    %39 = arith.cmpi slt, %37, %38 : vector<16x1xi32>
    %c2_i32 = arith.constant 2 : i32
    %40 = arith.cmpi slt, %23, %c2_i32 : i32
    %41 = vector.broadcast %40 : i1 to vector<16x1xi1>
    %42 = arith.andi %39, %41 : vector<16x1xi1>
    %cst_26 = arith.constant 0.000000e+00 : f32
    %43 = vector.shape_cast %42 : vector<16x1xi1> to vector<16x1xi1>
    %44 = vector.broadcast %43 : vector<16x1xi1> to vector<16x128xi1>
    %45 = vector.broadcast %cst_26 : f32 to vector<16x128xf32>
    %46 = arith.select %44, %21, %45 : vector<16x128xi1>, vector<16x128xf32>
    %47 = arith.truncf %46 : vector<16x128xf32> to vector<16x128xbf16>
    %c0_27 = arith.constant 0 : index
    %c0_28 = arith.constant 0 : index
    %48 = vector.load %arg4[%c0_27, %c0_28] : memref<16x128xbf16, #tpu.memory_space<vmem>>, vector<16x128xbf16>
    tpu.vector_store %arg4[%c0_27, %c0_28], %47 {strides = array<i32>} : memref<16x128xbf16, #tpu.memory_space<vmem>>, vector<16x128xbf16>,
    %c0_29 = arith.constant 0 : index
    %c0_30 = arith.constant 0 : index
    %c0_31 = arith.constant 0 : index
    %49 = vector.load %arg5[%c0_29, %c0_30, %c0_31] : memref<1x1x128xf32, #tpu.memory_space<vmem>>, vector<1x1x128xf32>
    %cst_32 = arith.constant dense<0.000000e+00> : vector<128xf32>
    %50 = vector.multi_reduction <add>, %46, %cst_32 [0] : vector<16x128xf32> to vector<128xf32>
    %51 = vector.shape_cast %50 : vector<128xf32> to vector<1x128xf32>
    %52 = vector.shape_cast %51 : vector<1x128xf32> to vector<1x1x128xf32>
    %53 = arith.addf %49, %52 : vector<1x1x128xf32>
    %c0_33 = arith.constant 0 : index
    %c0_34 = arith.constant 0 : index
    %c0_35 = arith.constant 0 : index
    %54 = vector.load %arg5[%c0_33, %c0_34, %c0_35] : memref<1x1x128xf32, #tpu.memory_space<vmem>>, vector<1x1x128xf32>
    tpu.vector_store %arg5[%c0_33, %c0_34, %c0_35], %53 {strides = array<i32>} : memref<1x1x128xf32, #tpu.memory_space<vmem>>, vector<1x1x128xf32>,
    %c0_36 = arith.constant 0 : index
    %c0_37 = arith.constant 0 : index
    %c0_38 = arith.constant 0 : index
    %55 = vector.load %arg6[%c0_36, %c0_37, %c0_38] : memref<1x1x128xf32, #tpu.memory_space<vmem>>, vector<1x1x128xf32>
    %56 = arith.mulf %46, %46 : vector<16x128xf32>
    %cst_39 = arith.constant dense<0.000000e+00> : vector<128xf32>
    %57 = vector.multi_reduction <add>, %56, %cst_39 [0] : vector<16x128xf32> to vector<128xf32>
    %58 = vector.shape_cast %57 : vector<128xf32> to vector<1x128xf32>
    %59 = vector.shape_cast %58 : vector<1x128xf32> to vector<1x1x128xf32>
    %60 = arith.addf %55, %59 : vector<1x1x128xf32>
    %c0_40 = arith.constant 0 : index
    %c0_41 = arith.constant 0 : index
    %c0_42 = arith.constant 0 : index
    %61 = vector.load %arg6[%c0_40, %c0_41, %c0_42] : memref<1x1x128xf32, #tpu.memory_space<vmem>>, vector<1x1x128xf32>
    tpu.vector_store %arg6[%c0_40, %c0_41, %c0_42], %60 {strides = array<i32>} : memref<1x1x128xf32, #tpu.memory_space<vmem>>, vector<1x1x128xf32>,
    return
  }
  func.func @transform_0(%arg0: i32, %arg1: i32) -> (i32, i32, i32) {
    %c1_i32 = arith.constant 1 : i32
    %0 = arith.muli %arg0, %c1_i32 : i32
    %1 = arith.addi %0, %arg1 : i32
    %c0_i32 = arith.constant 0 : i32
    %c0_i32_0 = arith.constant 0 : i32
    %c0_i32_1 = arith.constant 0 : i32
    return %1, %c0_i32, %c0_i32_0 : i32, i32, i32
  }
  func.func @transform_1(%arg0: i32, %arg1: i32) -> (i32, i32, i32) {
    %c0_i32 = arith.constant 0 : i32
    %c0_i32_0 = arith.constant 0 : i32
    %c0_i32_1 = arith.constant 0 : i32
    %c0_i32_2 = arith.constant 0 : i32
    return %c0_i32, %c0_i32_0, %c0_i32_1 : i32, i32, i32
  }
  func.func @transform_2(%arg0: i32, %arg1: i32) -> (i32, i32) {
    %c1_i32 = arith.constant 1 : i32
    %0 = arith.muli %arg0, %c1_i32 : i32
    %1 = arith.addi %0, %arg1 : i32
    %c0_i32 = arith.constant 0 : i32
    %c0_i32_0 = arith.constant 0 : i32
    return %1, %c0_i32 : i32, i32
  }
  func.func @transform_3(%arg0: i32, %arg1: i32) -> (i32, i32, i32) {
    %c0_i32 = arith.constant 0 : i32
    %c0_i32_0 = arith.constant 0 : i32
    %c0_i32_1 = arith.constant 0 : i32
    return %arg0, %c0_i32, %c0_i32_0 : i32, i32, i32
  }
  func.func @transform_4(%arg0: i32, %arg1: i32) -> (i32, i32, i32) {
    %c0_i32 = arith.constant 0 : i32
    %c0_i32_0 = arith.constant 0 : i32
    %c0_i32_1 = arith.constant 0 : i32
    return %arg0, %c0_i32, %c0_i32_0 : i32, i32, i32
  }
}

</mosaic_0001>

<llo_original>
// kernel: tpu_custom_call.1
$region0: #{tpu_custom_call.1}
  #allocation0 [shape = 'u32[]', space=smem, size = 0x4, offset = 0x4, fixed_abs, tag = 'smem constant byte address 0x4 - core index']
  #allocation1 [shape = 'u32[144,128]{1,0:T(1,128)}', space=vmem, size = 0x12000, scoped, tag = 'internal scratch']
  %s0 = inlined_call_operand.hbm [shape: bf16[2,32,128], index: 0, kind: input, shape index: {}]
  %s1 = inlined_call_operand.hbm [shape: bf16[3,128,128], index: 1, kind: input, shape index: {}]
  %s2 = inlined_call_operand.hbm [shape: bf16[32,128], index: 2, kind: output, shape index: {0}]
  %s3 = inlined_call_operand.hbm [shape: f32[2,1,128], index: 3, kind: output, shape index: {1}]
  %s4 = inlined_call_operand.hbm [shape: f32[2,1,128], index: 4, kind: output, shape index: {2}]
  %5 = xla_tuple %s2, %s3, %s4
  %s6 = sld [smem:[#allocation0]]
  $region69: #{tpu_custom_call.1} parent=0
    _
  %s8 = ssub.s32 1, %s6
  %s9 = scalar_select 0, %s8, %s6
  $region1: #{tpu_custom_call.1} parent=0
    #allocation2 [shape = 'u8[16384]{0}', space=vmem, size = 0x4000, scoped, tag = 'input window, operand 0']
    #allocation3 [shape = 's32[2]{0}', space=sflag, size = 0x8, scoped, tag = 'scoped memory for tpu_custom_call.1']
    #allocation4 [shape = 's32[2]{0}', space=sflag, size = 0x8, scoped, tag = 'scoped memory for tpu_custom_call.1']
    #allocation5 [shape = 'u8[98304]{0}', space=vmem, size = 0x18000, scoped, tag = 'input window, operand 1, single buffered']
    #allocation6 [shape = 's32[1]{0}', space=sflag, size = 0x4, scoped, tag = 'scoped memory for tpu_custom_call.1']
    #allocation7 [shape = 'u8[8192]{0}', space=vmem, size = 0x2000, scoped, tag = 'output window, operand 0']
    #allocation8 [shape = 'u8[1024]{0}', space=vmem, size = 0x400, scoped, tag = 'output window, operand 1']
    #allocation9 [shape = 's32[2]{0}', space=sflag, size = 0x8, scoped, tag = 'scoped memory for tpu_custom_call.1']
    #allocation10 [shape = 'u8[1024]{0}', space=vmem, size = 0x400, scoped, tag = 'output window, operand 2']
    %10 = vsyncpa [#allocation3], 0
    %s11 = scalar_lea.sflag [#allocation3], 1
    %12 = vsyncpa %s11, 0
    %13 = vsyncpa [#allocation6], 0
    %14 = vsyncpa [#allocation4], 0
    %s15 = scalar_lea.sflag [#allocation4], 1
    %16 = vsyncpa %s15, 0
    %17 = vsyncpa [#allocation9], 0
    %s18 = scalar_lea.sflag [#allocation9], 1
    %19 = vsyncpa %s18, 0
    loop: start=0, step=1, limit=4
    $region2: #{tpu_custom_call.1} parent=1 // loop_pre_header
      _
    $region3: #{tpu_custom_call.1} parent=1 // loop_header
      %s21 = sphi 0, %s25
      %p22 = scmp.ge.s32.totalorder %s21, 4
      %s28 = sphi 0, %s40
      %s29 = sphi 0, %s36
      %s30 = sphi 0, %s28
      %s31 = sphi 0, %s29
      %s32 = sphi 0, %s30
      %s33 = sphi 0, %s31
      %s45 = sphi 0, %s47
      %s48 = sphi 0, %s45
      %s49 = sphi 0, %s48
      %s65 = sphi 0, %s49
      %s69 = sphi 0, %s69
      %s71 = sphi 0, %s69
      %s72 = sphi 0, %s71
      %s86 = sphi 0, %s72
      %s94 = sphi 0, %s96
      %s97 = sphi 0, %s94
      %s98 = sphi 0, %s97
      %s114 = sphi 0, %s98
      %s120 = sphi 0, %s122
      %s123 = sphi 0, %s120
      %s124 = sphi 0, %s123
      %s140 = sphi 0, %s124
      %s146 = sphi 0, %s148
      %s149 = sphi 0, %s146
      %s150 = sphi 0, %s149
      %s166 = sphi 0, %s150
    $region4: #{tpu_custom_call.1} parent=1 // loop_header_branch
      %24 = sbr.rel (%p22) target = $region8
    $region5: #{tpu_custom_call.1} parent=1 // loop_body
      %s26 = ssub.s32 %s21, 1
      %s27 = ssub.s32 %s21, 2
      %s34 = sadd.s32 1, %s29
      %p35 = scmp.ge.s32.totalorder %s34, 1
      %s36 = scalar_select %p35, 0, %s34
      %s37 = sadd.s32 1, %s28
      %s38 = scalar_select %p35, %s37, %s28
      %p39 = scmp.ge.s32.totalorder %s38, 2
      %s40 = scalar_select %p39, 0, %s38
      %s41 = sadd.s32 %s28, %s29
      %s42 = sadd.s32 %s40, %s36
      %s43 = ssub.s32 %s41, %s42
      %p44 = scmp.eq.s32.totalorder %s43, 0
      %s46 = sadd.s32 %s45, 1
      %s47 = scalar_select %p44, %s45, %s46
      %p50 = pneg %p44
      %p51 = scmp.eq.s32.totalorder %s21, 1
      %p52 = por %p50, %p51
      %p53 = scmp.ne.s32.totalorder %s45, %s48
      %p54 = scmp.eq.s32.totalorder %s21, 0
      %p55 = por %p53, %p54
      %p56 = scmp.ne.s32.totalorder %s45, %s48
      %p57 = scmp.eq.s32.totalorder %s26, 1
      %p58 = por %p56, %p57
      %p59 = scmp.ne.s32.totalorder %s48, %s49
      %p60 = scmp.eq.s32.totalorder %s26, 0
      %p61 = por %p59, %p60
      %p62 = scmp.ne.s32.totalorder %s48, %s49
      %p63 = scmp.eq.s32.totalorder %s27, 1
      %p64 = por %p62, %p63
      %p66 = scmp.ne.s32.totalorder %s49, %s65
      %p67 = scmp.eq.s32.totalorder %s27, 0
      %p68 = por %p66, %p67
      %s70 = sadd.s32 %s69, 1
      %p73 = scmp.eq.s32.totalorder %s21, 1
      %p74 = scmp.ne.s32.totalorder %s69, %s71
      %p75 = scmp.eq.s32.totalorder %s21, 0
      %p76 = por %p74, %p75
      %p77 = scmp.ne.s32.totalorder %s69, %s71
      %p78 = scmp.eq.s32.totalorder %s26, 1
      %p79 = por %p77, %p78
      %p80 = scmp.ne.s32.totalorder %s71, %s72
      %p81 = scmp.eq.s32.totalorder %s26, 0
      %p82 = por %p80, %p81
      %p83 = scmp.ne.s32.totalorder %s71, %s72
      %p84 = scmp.eq.s32.totalorder %s27, 1
      %p85 = por %p83, %p84
      %p87 = scmp.ne.s32.totalorder %s72, %s86
      %p88 = scmp.eq.s32.totalorder %s27, 0
      %p89 = por %p87, %p88
      %s90 = sadd.s32 %s28, %s29
      %s91 = sadd.s32 %s40, %s36
      %s92 = ssub.s32 %s90, %s91
      %p93 = scmp.eq.s32.totalorder %s92, 0
      %s95 = sadd.s32 %s94, 1
      %s96 = scalar_select %p93, %s94, %s95
      %p99 = pneg %p93
      %p100 = scmp.eq.s32.totalorder %s21, 1
      %p101 = por %p99, %p100
      %p102 = scmp.ne.s32.totalorder %s94, %s97
      %p103 = scmp.eq.s32.totalorder %s21, 0
      %p104 = por %p102, %p103
      %p105 = scmp.ne.s32.totalorder %s94, %s97
      %p106 = scmp.eq.s32.totalorder %s26, 1
      %p107 = por %p105, %p106
      %p108 = scmp.ne.s32.totalorder %s97, %s98
      %p109 = scmp.eq.s32.totalorder %s26, 0
      %p110 = por %p108, %p109
      %p111 = scmp.ne.s32.totalorder %s97, %s98
      %p112 = scmp.eq.s32.totalorder %s27, 1
      %p113 = por %p111, %p112
      %p115 = scmp.ne.s32.totalorder %s98, %s114
      %p116 = scmp.eq.s32.totalorder %s27, 0
      %p117 = por %p115, %p116
      %s118 = ssub.s32 %s28, %s40
      %p119 = scmp.eq.s32.totalorder %s118, 0
      %s121 = sadd.s32 %s120, 1
      %s122 = scalar_select %p119, %s120, %s121
      %p125 = pneg %p119
      %p126 = scmp.eq.s32.totalorder %s21, 1
      %p127 = por %p125, %p126
      %p128 = scmp.ne.s32.totalorder %s120, %s123
      %p129 = scmp.eq.s32.totalorder %s21, 0
      %p130 = por %p128, %p129
      %p131 = scmp.ne.s32.totalorder %s120, %s123
      %p132 = scmp.eq.s32.totalorder %s26, 1
      %p133 = por %p131, %p132
      %p134 = scmp.ne.s32.totalorder %s123, %s124
      %p135 = scmp.eq.s32.totalorder %s26, 0
      %p136 = por %p134, %p135
      %p137 = scmp.ne.s32.totalorder %s123, %s124
      %p138 = scmp.eq.s32.totalorder %s27, 1
      %p139 = por %p137, %p138
      %p141 = scmp.ne.s32.totalorder %s124, %s140
      %p142 = scmp.eq.s32.totalorder %s27, 0
      %p143 = por %p141, %p142
      %s144 = ssub.s32 %s28, %s40
      %p145 = scmp.eq.s32.totalorder %s144, 0
      %s147 = sadd.s32 %s146, 1
      %s148 = scalar_select %p145, %s146, %s147
      %p151 = pneg %p145
      %p152 = scmp.eq.s32.totalorder %s21, 1
      %p153 = por %p151, %p152
      %p154 = scmp.ne.s32.totalorder %s146, %s149
      %p155 = scmp.eq.s32.totalorder %s21, 0
      %p156 = por %p154, %p155
      %p157 = scmp.ne.s32.totalorder %s146, %s149
      %p158 = scmp.eq.s32.totalorder %s26, 1
      %p159 = por %p157, %p158
      %p160 = scmp.ne.s32.totalorder %s149, %s150
      %p161 = scmp.eq.s32.totalorder %s26, 0
      %p162 = por %p160, %p161
      %p163 = scmp.ne.s32.totalorder %s149, %s150
      %p164 = scmp.eq.s32.totalorder %s27, 1
      %p165 = por %p163, %p164
      %p167 = scmp.ne.s32.totalorder %s150, %s166
      %p168 = scmp.eq.s32.totalorder %s27, 0
      %p169 = por %p167, %p168
      %p170 = scmp.le.s32.totalorder 1, %s21
      %p171 = scmp.lt.s32.totalorder %s21, 3
      %p172 = pnand %p170, %p171
      %p173 = pneg %p172
      // Predicated region
      $region9: #{tpu_custom_call.1} parent=5 // pred_check
        _
      $region10: #{tpu_custom_call.1} parent=5 // pred_check_branch
        %175 = sbr.rel (%p172) target = $region12
      $region11: #{tpu_custom_call.1} parent=5 // pred_region
        %s176 = ssub.s32 %s21, 1
        // Predicated region
        $region13: #{tpu_custom_call.1} parent=11 // pred_check
          %p177 = pneg %p82
        $region14: #{tpu_custom_call.1} parent=11 // pred_check_branch
          %179 = sbr.rel (%p177) target = $region16
        $region15: #{tpu_custom_call.1} parent=11 // pred_region
          %s181 = ssub.s32 3072, 3072
          %182 = vsyncadd [#allocation6], %s181
          %s183 = sshll.u32 [#allocation5], 4
          %s184 = int_to_ptr.vmem [resolvable:$true] %s183
          %189 = dma.hbm_to_vmem [thread:$0]  %s1, 3072, %s184, [#allocation6], 64, 64, 4
        $region16: #{tpu_custom_call.1} parent=11 // pred_fallthru
          _
      $region12: #{tpu_custom_call.1} parent=5 // pred_fallthru
        _
      %p190 = scmp.lt.s32.totalorder %s21, 2
      // Predicated region
      $region17: #{tpu_custom_call.1} parent=5 // pred_check
        %p191 = pneg %p190
      $region18: #{tpu_custom_call.1} parent=5 // pred_check_branch
        %193 = sbr.rel (%p191) target = $region20
      $region19: #{tpu_custom_call.1} parent=5 // pred_region
        // Predicated region
        $region21: #{tpu_custom_call.1} parent=19 // pred_check
          %p194 = pneg %p55
        $region22: #{tpu_custom_call.1} parent=19 // pred_check_branch
          %196 = sbr.rel (%p194) target = $region24
        $region23: #{tpu_custom_call.1} parent=19 // pred_region
          %s197 = sand.u32 %s45, 1
          %s198 = scalar_lea.sflag [#allocation3], %s197
          %s199 = sand.u32 %s45, 1
          %s200 = smul.addr %s199, 16
          %s201 = scalar_lea.vmem [#allocation2], %s200
          %s202 = sadd.s32 %s28, %s29
          %s204 = ssub.s32 256, 256
          %205 = vsyncadd %s198, %s204
          %s206 = smul.addr %s202, 4
          %s207 = smul.addr %s206, 64
          %s208 = scalar_lea.hbm %s0, %s207
          %s209 = sshll.u32 %s201, 4
          %s210 = int_to_ptr.vmem [resolvable:$true] %s209
          %215 = dma.hbm_to_vmem [thread:$0]  %s208, 256, %s210, %s198, 64, 64, 4
        $region24: #{tpu_custom_call.1} parent=19 // pred_fallthru
          _
      $region20: #{tpu_custom_call.1} parent=5 // pred_fallthru
        _
      %p216 = scmp.le.s32.totalorder 1, %s21
      %p217 = scmp.lt.s32.totalorder %s21, 3
      %p218 = pnand %p216, %p217
      %p219 = pneg %p218
      // Predicated region
      $region25: #{tpu_custom_call.1} parent=5 // pred_check
        _
      $region26: #{tpu_custom_call.1} parent=5 // pred_check_branch
        %221 = sbr.rel (%p218) target = $region28
      $region27: #{tpu_custom_call.1} parent=5 // pred_region
        %s222 = ssub.s32 %s21, 1
        %s223 = sand.u32 %s48, 1
        %s224 = scalar_lea.sflag [#allocation3], %s223
        %s225 = sand.u32 %s48, 1
        %s226 = smul.addr %s225, 16
        %s227 = scalar_lea.vmem [#allocation2], %s226
        // Predicated region
        $region29: #{tpu_custom_call.1} parent=27 // pred_check
          %p228 = pneg %p61
        $region30: #{tpu_custom_call.1} parent=27 // pred_check_branch
          %230 = sbr.rel (%p228) target = $region32
        $region31: #{tpu_custom_call.1} parent=27 // pred_region
          %231 = dma.done %s224, 256
        $region32: #{tpu_custom_call.1} parent=27 // pred_fallthru
          _
        // Predicated region
        $region33: #{tpu_custom_call.1} parent=27 // pred_check
          %p232 = pneg %p82
        $region34: #{tpu_custom_call.1} parent=27 // pred_check_branch
          %234 = sbr.rel (%p232) target = $region36
        $region35: #{tpu_custom_call.1} parent=27 // pred_region
          %235 = dma.done [#allocation6], 3072
        $region36: #{tpu_custom_call.1} parent=27 // pred_fallthru
          _
        %s236 = sand.u32 %s48, 1
        %s237 = scalar_lea.sflag [#allocation3], %s236
        %s238 = sand.u32 %s48, 1
        %s239 = smul.addr %s238, 16
        %s240 = scalar_lea.vmem [#allocation2], %s239
        %p241 = pneg %p61
        %p242 = pneg %p58
        %p243 = pneg %p82
        %p244 = pneg %p79
        %p245 = pneg %p110
        %p246 = pneg %p107
        %s247 = sand.u32 %s97, 1
        %s248 = scalar_lea.sflag [#allocation4], %s247
        %s249 = sand.u32 %s97, 1
        %s250 = smul.addr %s249, 8
        %s251 = scalar_lea.vmem [#allocation7], %s250
        %p252 = pneg %p136
        %p253 = pneg %p133
        %s254 = sand.u32 %s26, 1
        %s255 = scalar_lea.sflag [#allocation9], %s254
        %s256 = sand.u32 %s123, 1
        %s257 = scalar_lea.vmem [#allocation8], %s256
        %p258 = pneg %p162
        %p259 = pneg %p159
        %s260 = sand.u32 %s26, 1
        %s261 = scalar_lea.sflag [#allocation9], %s260
        %s262 = sand.u32 %s149, 1
        %s263 = scalar_lea.vmem [#allocation10], %s262
        %s264 = sadd.s32 %s30, %s31
        %s265 = sadd.s32 %s30, %s31
        %s266 = smul.u32 2, %s265
        %p268 = scmp.eq.s32.totalorder %s31, 0
        // Predicated region
        $region37: #{tpu_custom_call.1} parent=27 // pred_check
          %p269 = pneg %p268
        $region38: #{tpu_custom_call.1} parent=27 // pred_check_branch
          %271 = sbr.rel (%p269) target = $region40
        $region39: #{tpu_custom_call.1} parent=27 // pred_region
          %272 = vst [vmem:[%s257] sm:$0x1] 0.0
          %273 = vst [vmem:[%s263] sm:$0x1] 0.0
        $region40: #{tpu_custom_call.1} parent=27 // pred_fallthru
          _
        %v274 = vld [vmem:[%s227] sm:$0xf]
        %v275 = vld [vmem:[%s227 + $0x4] sm:$0xf]
        %v276 = vld [vmem:[#allocation5] sm:$0xf]
        %v277 = vld [vmem:[#allocation5 + $0x4] sm:$0xf]
        %v278 = vld [vmem:[#allocation5 + $0x8] sm:$0xf]
        %v279 = vld [vmem:[#allocation5 + $0xc] sm:$0xf]
        %v280 = vld [vmem:[#allocation5 + $0x10] sm:$0xf]
        %v281 = vld [vmem:[#allocation5 + $0x14] sm:$0xf]
        %v282 = vld [vmem:[#allocation5 + $0x18] sm:$0xf]
        %v283 = vld [vmem:[#allocation5 + $0x1c] sm:$0xf]
        %v284 = vld [vmem:[#allocation5 + $0x20] sm:$0xf]
        %v285 = vld [vmem:[#allocation5 + $0x24] sm:$0xf]
        %v286 = vld [vmem:[#allocation5 + $0x28] sm:$0xf]
        %v287 = vld [vmem:[#allocation5 + $0x2c] sm:$0xf]
        %v288 = vld [vmem:[#allocation5 + $0x30] sm:$0xf]
        %v289 = vld [vmem:[#allocation5 + $0x34] sm:$0xf]
        %v290 = vld [vmem:[#allocation5 + $0x38] sm:$0xf]
        %v291 = vld [vmem:[#allocation5 + $0x3c] sm:$0xf]
        %v292 = vld [vmem:[%s227 + $0x8] sm:$0x1]
        %s293 = scalar_lea.vmem [#allocation5], 64
        %v294 = vld [vmem:[%s293] sm:$0xf]
        %v295 = vld [vmem:[%s293 + $0x4] sm:$0xf]
        %v296 = vld [vmem:[%s293 + $0x8] sm:$0xf]
        %v297 = vld [vmem:[%s293 + $0xc] sm:$0xf]
        %v298 = vld [vmem:[%s293 + $0x10] sm:$0xf]
        %v299 = vld [vmem:[%s293 + $0x14] sm:$0xf]
        %v300 = vld [vmem:[%s293 + $0x18] sm:$0xf]
        %v301 = vld [vmem:[%s293 + $0x1c] sm:$0xf]
        %v302 = vld [vmem:[%s293 + $0x20] sm:$0xf]
        %v303 = vld [vmem:[%s293 + $0x24] sm:$0xf]
        %v304 = vld [vmem:[%s293 + $0x28] sm:$0xf]
        %v305 = vld [vmem:[%s293 + $0x2c] sm:$0xf]
        %v306 = vld [vmem:[%s293 + $0x30] sm:$0xf]
        %v307 = vld [vmem:[%s293 + $0x34] sm:$0xf]
        %v308 = vld [vmem:[%s293 + $0x38] sm:$0xf]
        %v309 = vld [vmem:[%s293 + $0x3c] sm:$0xf]
        %v313 = vunpack.c.l.b16 %v274
        %v314 = vunpack.c.l.b16 %v275
        %v315 = vunpack.c.l.b16 %v292
        %v316 = vpack.c.b16 %v314, %v313
        %v317 = vpack.c.b16 %v315, %v315
        %vm318 = vsmask.f32 7424
        %v320 = vshrl.u32 %v316, 16
        %v322 = vshll.u32 %v316, 16
        %v324 = vrot.slane %v322, 1
        %v325 = vor.u32 %v320, %v324
        %v327 = vshll.u32 %v317, 16
        %v329 = vrot.slane %v327, 1
        %v330 = vsel %vm318, %v325, %v329
        %v348 = vunpack.c.l.b16 %v294
        %v349 = vunpack.c.l.b16 %v295
        %v350 = vunpack.c.l.b16 %v296
        %v351 = vunpack.c.l.b16 %v297
        %v352 = vunpack.c.l.b16 %v298
        %v353 = vunpack.c.l.b16 %v299
        %v354 = vunpack.c.l.b16 %v300
        %v355 = vunpack.c.l.b16 %v301
        %v356 = vunpack.c.l.b16 %v302
        %v357 = vunpack.c.l.b16 %v303
        %v358 = vunpack.c.l.b16 %v304
        %v359 = vunpack.c.l.b16 %v305
        %v360 = vunpack.c.l.b16 %v306
        %v361 = vunpack.c.l.b16 %v307
        %v362 = vunpack.c.l.b16 %v308
        %v363 = vunpack.c.l.b16 %v309
        %v364 = vpack.c.b16 %v349, %v348
        %v365 = vpack.c.b16 %v351, %v350
        %v366 = vpack.c.b16 %v353, %v352
        %v367 = vpack.c.b16 %v355, %v354
        %v368 = vpack.c.b16 %v357, %v356
        %v369 = vpack.c.b16 %v359, %v358
        %v370 = vpack.c.b16 %v361, %v360
        %v371 = vpack.c.b16 %v363, %v362
        %380 = vmatprep.subr.bf16.mxu0 0
        %381 = vmatpush1.bf16.msra.mxu0 %v364
        %382 = vmatprep.subr.bf16.mxu0 0
        %383 = vmatpush1.bf16.msra.mxu0 %v365
        %384 = vmatprep.subr.bf16.mxu0 0
        %385 = vmatpush1.bf16.msra.mxu0 %v366
        %386 = vmatprep.subr.bf16.mxu0 0
        %387 = vmatpush1.bf16.msra.mxu0 %v367
        %388 = vmatprep.subr.bf16.mxu0 0
        %389 = vmatpush1.bf16.msra.mxu0 %v368
        %390 = vmatprep.subr.bf16.mxu0 0
        %391 = vmatpush1.bf16.msra.mxu0 %v369
        %392 = vmatprep.subr.bf16.mxu0 0
        %393 = vmatpush1.bf16.msra.mxu0 %v370
        %394 = vmatprep.subr.bf16.mxu0 0
        %395 = vmatpush1.bf16.msra.mxu0 %v371
        %396 = vmatprep.subr.bf16.mxu0 0
        %397 = vmatpush1.bf16.msra.mxu0 0
        %398 = vmatprep.subr.bf16.mxu0 0
        %399 = vmatpush1.bf16.msra.mxu0 0
        %400 = vmatprep.subr.bf16.mxu0 0
        %401 = vmatpush1.bf16.msra.mxu0 0
        %402 = vmatprep.subr.bf16.mxu0 0
        %403 = vmatpush1.bf16.msra.mxu0 0
        %404 = vmatprep.subr.bf16.mxu0 0
        %405 = vmatpush1.bf16.msra.mxu0 0
        %406 = vmatprep.subr.bf16.mxu0 0
        %407 = vmatpush1.bf16.msra.mxu0 0
        %408 = vmatprep.subr.bf16.mxu0 0
        %409 = vmatpush1.bf16.msra.mxu0 0
        %410 = vmatprep.subr.bf16.mxu0 0
        %411 = vmatpush1.bf16.msra.mxu0 0
        %412 = vmatprep.mubr.bf16.mxu0 0
        %413 = vmatmul.mubr.bf16.gmra.mrb[0].mxu0 %v330
        %v414 = vpop.f32.mrb[0].mxu0
        %v415 = vadd.f32 0.0, %v414
        %v416 = vpop.f32.mrb[0].mxu0
        %v417 = vpop.f32.mrb[0].mxu0
        %v418 = vadd.f32 0.0, %v417
        %v419 = vpop.f32.mrb[0].mxu0
        %420 = vdwg.mxu0
        %v438 = vunpack.c.l.b16 %v276
        %v439 = vunpack.c.l.b16 %v277
        %v440 = vunpack.c.l.b16 %v278
        %v441 = vunpack.c.l.b16 %v279
        %v442 = vunpack.c.l.b16 %v280
        %v443 = vunpack.c.l.b16 %v281
        %v444 = vunpack.c.l.b16 %v282
        %v445 = vunpack.c.l.b16 %v283
        %v446 = vunpack.c.l.b16 %v284
        %v447 = vunpack.c.l.b16 %v285
        %v448 = vunpack.c.l.b16 %v286
        %v449 = vunpack.c.l.b16 %v287
        %v450 = vunpack.c.l.b16 %v288
        %v451 = vunpack.c.l.b16 %v289
        %v452 = vunpack.c.l.b16 %v290
        %v453 = vunpack.c.l.b16 %v291
        %v454 = vpack.c.b16 %v439, %v438
        %v455 = vpack.c.b16 %v441, %v440
        %v456 = vpack.c.b16 %v443, %v442
        %v457 = vpack.c.b16 %v445, %v444
        %v458 = vpack.c.b16 %v447, %v446
        %v459 = vpack.c.b16 %v449, %v448
        %v460 = vpack.c.b16 %v451, %v450
        %v461 = vpack.c.b16 %v453, %v452
        %470 = vmatprep.subr.bf16.mxu0 0
        %471 = vmatpush1.bf16.msra.mxu0 %v454
        %472 = vmatprep.subr.bf16.mxu0 0
        %473 = vmatpush1.bf16.msra.mxu0 %v455
        %474 = vmatprep.subr.bf16.mxu0 0
        %475 = vmatpush1.bf16.msra.mxu0 %v456
        %476 = vmatprep.subr.bf16.mxu0 0
        %477 = vmatpush1.bf16.msra.mxu0 %v457
        %478 = vmatprep.subr.bf16.mxu0 0
        %479 = vmatpush1.bf16.msra.mxu0 %v458
        %480 = vmatprep.subr.bf16.mxu0 0
        %481 = vmatpush1.bf16.msra.mxu0 %v459
        %482 = vmatprep.subr.bf16.mxu0 0
        %483 = vmatpush1.bf16.msra.mxu0 %v460
        %484 = vmatprep.subr.bf16.mxu0 0
        %485 = vmatpush1.bf16.msra.mxu0 %v461
        %486 = vmatprep.subr.bf16.mxu0 0
        %487 = vmatpush1.bf16.msra.mxu0 0
        %488 = vmatprep.subr.bf16.mxu0 0
        %489 = vmatpush1.bf16.msra.mxu0 0
        %490 = vmatprep.subr.bf16.mxu0 0
        %491 = vmatpush1.bf16.msra.mxu0 0
        %492 = vmatprep.subr.bf16.mxu0 0
        %493 = vmatpush1.bf16.msra.mxu0 0
        %494 = vmatprep.subr.bf16.mxu0 0
        %495 = vmatpush1.bf16.msra.mxu0 0
        %496 = vmatprep.subr.bf16.mxu0 0
        %497 = vmatpush1.bf16.msra.mxu0 0
        %498 = vmatprep.subr.bf16.mxu0 0
        %499 = vmatpush1.bf16.msra.mxu0 0
        %500 = vmatprep.subr.bf16.mxu0 0
        %501 = vmatpush1.bf16.msra.mxu0 0
        %502 = vmatprep.mubr.bf16.mxu0 0
        %503 = vmatmul.mubr.bf16.gmra.mrb[0].mxu0 %v316
        %v504 = vpop.f32.mrb[0].mxu0
        %v505 = vadd.f32 %v415, %v504
        %v506 = vpop.f32.mrb[0].mxu0
        %v507 = vpop.f32.mrb[0].mxu0
        %v508 = vadd.f32 %v418, %v507
        %v509 = vpop.f32.mrb[0].mxu0
        %510 = vdwg.mxu0
        %v511 = vld [vmem:[%s227] sm:$0xe]
        %s512 = scalar_lea.vmem [#allocation5], 128
        %v513 = vld [vmem:[%s512] sm:$0xf]
        %v514 = vld [vmem:[%s512 + $0x4] sm:$0xf]
        %v515 = vld [vmem:[%s512 + $0x8] sm:$0xf]
        %v516 = vld [vmem:[%s512 + $0xc] sm:$0xf]
        %v517 = vld [vmem:[%s512 + $0x10] sm:$0xf]
        %v518 = vld [vmem:[%s512 + $0x14] sm:$0xf]
        %v519 = vld [vmem:[%s512 + $0x18] sm:$0xf]
        %v520 = vld [vmem:[%s512 + $0x1c] sm:$0xf]
        %v521 = vld [vmem:[%s512 + $0x20] sm:$0xf]
        %v522 = vld [vmem:[%s512 + $0x24] sm:$0xf]
        %v523 = vld [vmem:[%s512 + $0x28] sm:$0xf]
        %v524 = vld [vmem:[%s512 + $0x2c] sm:$0xf]
        %v525 = vld [vmem:[%s512 + $0x30] sm:$0xf]
        %v526 = vld [vmem:[%s512 + $0x34] sm:$0xf]
        %v527 = vld [vmem:[%s512 + $0x38] sm:$0xf]
        %v528 = vld [vmem:[%s512 + $0x3c] sm:$0xf]
        %v530 = vunpack.c.l.b16 %v511
        %v531 = vpack.c.b16 %v314, %v530
        %vm532 = vcmask 1046528
        %v533 = vrot.slane %v531, 1
        %v534 = vrot.slane %v317, 1
        %v535 = vsel %vm532, %v533, %v534
        %v553 = vunpack.c.l.b16 %v513
        %v554 = vunpack.c.l.b16 %v514
        %v555 = vunpack.c.l.b16 %v515
        %v556 = vunpack.c.l.b16 %v516
        %v557 = vunpack.c.l.b16 %v517
        %v558 = vunpack.c.l.b16 %v518
        %v559 = vunpack.c.l.b16 %v519
        %v560 = vunpack.c.l.b16 %v520
        %v561 = vunpack.c.l.b16 %v521
        %v562 = vunpack.c.l.b16 %v522
        %v563 = vunpack.c.l.b16 %v523
        %v564 = vunpack.c.l.b16 %v524
        %v565 = vunpack.c.l.b16 %v525
        %v566 = vunpack.c.l.b16 %v526
        %v567 = vunpack.c.l.b16 %v527
        %v568 = vunpack.c.l.b16 %v528
        %v569 = vpack.c.b16 %v554, %v553
        %v570 = vpack.c.b16 %v556, %v555
        %v571 = vpack.c.b16 %v558, %v557
        %v572 = vpack.c.b16 %v560, %v559
        %v573 = vpack.c.b16 %v562, %v561
        %v574 = vpack.c.b16 %v564, %v563
        %v575 = vpack.c.b16 %v566, %v565
        %v576 = vpack.c.b16 %v568, %v567
        %585 = vmatprep.subr.bf16.mxu0 0
        %586 = vmatpush1.bf16.msra.mxu0 %v569
        %587 = vmatprep.subr.bf16.mxu0 0
        %588 = vmatpush1.bf16.msra.mxu0 %v570
        %589 = vmatprep.subr.bf16.mxu0 0
        %590 = vmatpush1.bf16.msra.mxu0 %v571
        %591 = vmatprep.subr.bf16.mxu0 0
        %592 = vmatpush1.bf16.msra.mxu0 %v572
        %593 = vmatprep.subr.bf16.mxu0 0
        %594 = vmatpush1.bf16.msra.mxu0 %v573
        %595 = vmatprep.subr.bf16.mxu0 0
        %596 = vmatpush1.bf16.msra.mxu0 %v574
        %597 = vmatprep.subr.bf16.mxu0 0
        %598 = vmatpush1.bf16.msra.mxu0 %v575
        %599 = vmatprep.subr.bf16.mxu0 0
        %600 = vmatpush1.bf16.msra.mxu0 %v576
        %601 = vmatprep.subr.bf16.mxu0 0
        %602 = vmatpush1.bf16.msra.mxu0 0
        %603 = vmatprep.subr.bf16.mxu0 0
        %604 = vmatpush1.bf16.msra.mxu0 0
        %605 = vmatprep.subr.bf16.mxu0 0
        %606 = vmatpush1.bf16.msra.mxu0 0
        %607 = vmatprep.subr.bf16.mxu0 0
        %608 = vmatpush1.bf16.msra.mxu0 0
        %609 = vmatprep.subr.bf16.mxu0 0
        %610 = vmatpush1.bf16.msra.mxu0 0
        %611 = vmatprep.subr.bf16.mxu0 0
        %612 = vmatpush1.bf16.msra.mxu0 0
        %613 = vmatprep.subr.bf16.mxu0 0
        %614 = vmatpush1.bf16.msra.mxu0 0
        %615 = vmatprep.subr.bf16.mxu0 0
        %616 = vmatpush1.bf16.msra.mxu0 0
        %617 = vmatprep.mubr.bf16.mxu0 0
        %618 = vmatmul.mubr.bf16.gmra.mrb[0].mxu0 %v535
        %v619 = vpop.f32.mrb[0].mxu0
        %v620 = vadd.f32 0.0, %v619
        %v621 = vpop.f32.mrb[0].mxu0
        %v622 = vpop.f32.mrb[0].mxu0
        %v623 = vadd.f32 0.0, %v622
        %v624 = vpop.f32.mrb[0].mxu0
        %625 = vdwg.mxu0
        %v626 = vadd.f32 %v505, %v620
        %v627 = vadd.f32 %v508, %v623
        %v628 = vmax.f32 %v626, 0.0
        %v629 = vmax.f32 %v627, 0.0
        %s630 = sadd.s32 %s30, %s31
        %v631 = vlaneseq
        %v632 = vshrl.u32 %v631, 7
        %v633 = vadd.s32 %v632, 8
        %vm634 = vcmp.lt.s32.totalorder %v632, 16
        %vm635 = vcmp.lt.s32.totalorder %v633, 16
        %p636 = scmp.lt.s32.totalorder %s630, 2
        %s637 = scalar_select %p636, 1, 0
        %v638 = vstv %s637
        %vm639 = vcmp.eq.s32.totalorder %v638, 1
        %vm640 = vmand %vm634, %vm639
        %vm641 = vmand %vm635, %vm639
        %v642 = vsel %vm640, 1, 0
        %v643 = vsel %vm641, 1, 0
        %vm644 = vcmp.eq.s32.totalorder %v642, 1
        %vm645 = vcmp.eq.s32.totalorder %v643, 1
        %v646 = vsel %vm644, %v628, 0.0
        %v647 = vsel %vm645, %v629, 0.0
        %v648 = vpack.c.bf16 %v647, %v646
        %v650 = vunpack.c.l.b16 %v648
        %v651 = vunpack.c.h.b16 %v648
        %v652 = vpack.c.b16 %v650, %v650
        %v653 = vpack.c.b16 %v651, %v651
        %656 = vst [vmem:[%s251] sm:$0xf] %v652
        %657 = vst [vmem:[%s251 + $0x4] sm:$0xf] %v653
        %v658 = vld [vmem:[%s257] sm:$0x1]
        %v659 = vadd.f32 %v646, %v647
        %v660 = vrot.slane %v659, 4
        %v661 = vadd.f32 %v659, %v660
        %v662 = vrot.slane %v661, 2
        %v663 = vadd.f32 %v661, %v662
        %v664 = vrot.slane %v663, 1
        %v665 = vadd.f32 %v663, %v664
        %v666 = vadd.f32 %v658, %v665
        %667 = vst [vmem:[%s257] sm:$0x1] %v666
        %v668 = vld [vmem:[%s263] sm:$0x1]
        %v669 = vmul.f32 %v646, %v646
        %v670 = vmul.f32 %v647, %v647
        %v671 = vadd.f32 %v669, %v670
        %v672 = vrot.slane %v671, 4
        %v673 = vadd.f32 %v671, %v672
        %v674 = vrot.slane %v673, 2
        %v675 = vadd.f32 %v673, %v674
        %v676 = vrot.slane %v675, 1
        %v677 = vadd.f32 %v675, %v676
        %v678 = vadd.f32 %v668, %v677
        %679 = vst [vmem:[%s263] sm:$0x1] %v678
        %s680 = sand.u32 %s97, 1
        %s681 = scalar_lea.sflag [#allocation4], %s680
        %s682 = sand.u32 %s97, 1
        %s683 = smul.addr %s682, 8
        %s684 = scalar_lea.vmem [#allocation7], %s683
        %s685 = sand.u32 %s26, 1
        %s686 = scalar_lea.sflag [#allocation9], %s685
        %s687 = sand.u32 %s123, 1
        %s688 = scalar_lea.vmem [#allocation8], %s687
        %s689 = sand.u32 %s26, 1
        %s690 = scalar_lea.sflag [#allocation9], %s689
        %s691 = sand.u32 %s149, 1
        %s692 = scalar_lea.vmem [#allocation10], %s691
        // Predicated region
        $region41: #{tpu_custom_call.1} parent=27 // pred_check
          %p693 = pneg %p107
        $region42: #{tpu_custom_call.1} parent=27 // pred_check_branch
          %695 = sbr.rel (%p693) target = $region44
        $region43: #{tpu_custom_call.1} parent=27 // pred_region
          %s696 = sadd.s32 %s30, %s31
          %s697 = smul.u32 2, %s696
          %s699 = ssub.s32 128, 128
          %700 = vsyncadd %s681, %s699
          %s701 = smul.addr %s697, 64
          %s702 = scalar_lea.hbm %s2, %s701
          %s703 = sshll.u32 %s684, 4
          %s704 = int_to_ptr.vmem [resolvable:$true] %s703
          %709 = dma.vmem_to_hbm [thread:$0]  %s704, 128, %s702, %s681, 64, 64, 4
        $region44: #{tpu_custom_call.1} parent=27 // pred_fallthru
          _
        // Predicated region
        $region45: #{tpu_custom_call.1} parent=27 // pred_check
          %p710 = pneg %p133
        $region46: #{tpu_custom_call.1} parent=27 // pred_check_branch
          %712 = sbr.rel (%p710) target = $region48
        $region47: #{tpu_custom_call.1} parent=27 // pred_region
          %s714 = ssub.s32 16, 16
          %715 = vsyncadd %s686, %s714
          %s716 = smul.addr %s30, 16
          %s717 = scalar_lea.hbm %s3, %s716
          %s719 = sshll.u32 %s688, 4
          %s720 = int_to_ptr.vmem [resolvable:$true] %s719
          %722 = dma.vmem_to_hbm [thread:$0]  %s720, 16, %s717, %s686
        $region48: #{tpu_custom_call.1} parent=27 // pred_fallthru
          _
        // Predicated region
        $region49: #{tpu_custom_call.1} parent=27 // pred_check
          %p723 = pneg %p159
        $region50: #{tpu_custom_call.1} parent=27 // pred_check_branch
          %725 = sbr.rel (%p723) target = $region52
        $region51: #{tpu_custom_call.1} parent=27 // pred_region
          %s727 = ssub.s32 16, 16
          %728 = vsyncadd %s690, %s727
          %s729 = smul.addr %s30, 16
          %s730 = scalar_lea.hbm %s4, %s729
          %s732 = sshll.u32 %s692, 4
          %s733 = int_to_ptr.vmem [resolvable:$true] %s732
          %735 = dma.vmem_to_hbm [thread:$0]  %s733, 16, %s730, %s690
        $region52: #{tpu_custom_call.1} parent=27 // pred_fallthru
          _
      $region28: #{tpu_custom_call.1} parent=5 // pred_fallthru
        _
      %p736 = scmp.le.s32.totalorder 2, %s21
      // Predicated region
      $region53: #{tpu_custom_call.1} parent=5 // pred_check
        %p737 = pneg %p736
      $region54: #{tpu_custom_call.1} parent=5 // pred_check_branch
        %739 = sbr.rel (%p737) target = $region56
      $region55: #{tpu_custom_call.1} parent=5 // pred_region
        %s740 = ssub.s32 %s21, 2
        // Predicated region
        $region57: #{tpu_custom_call.1} parent=55 // pred_check
          %p741 = pneg %p113
        $region58: #{tpu_custom_call.1} parent=55 // pred_check_branch
          %743 = sbr.rel (%p741) target = $region60
        $region59: #{tpu_custom_call.1} parent=55 // pred_region
          %s744 = sand.u32 %s98, 1
          %s745 = scalar_lea.sflag [#allocation4], %s744
          %s746 = sand.u32 %s98, 1
          %s747 = smul.addr %s746, 8
          %s748 = scalar_lea.vmem [#allocation7], %s747
          %749 = dma.done %s745, 128
        $region60: #{tpu_custom_call.1} parent=55 // pred_fallthru
          _
        // Predicated region
        $region61: #{tpu_custom_call.1} parent=55 // pred_check
          %p750 = pneg %p139
        $region62: #{tpu_custom_call.1} parent=55 // pred_check_branch
          %752 = sbr.rel (%p750) target = $region64
        $region63: #{tpu_custom_call.1} parent=55 // pred_region
          %s753 = sand.u32 %s27, 1
          %s754 = scalar_lea.sflag [#allocation9], %s753
          %s755 = sand.u32 %s124, 1
          %s756 = scalar_lea.vmem [#allocation8], %s755
          %757 = dma.done %s754, 16
        $region64: #{tpu_custom_call.1} parent=55 // pred_fallthru
          _
        // Predicated region
        $region65: #{tpu_custom_call.1} parent=55 // pred_check
          %p758 = pneg %p165
        $region66: #{tpu_custom_call.1} parent=55 // pred_check_branch
          %760 = sbr.rel (%p758) target = $region68
        $region67: #{tpu_custom_call.1} parent=55 // pred_region
          %s761 = sand.u32 %s27, 1
          %s762 = scalar_lea.sflag [#allocation9], %s761
          %s763 = sand.u32 %s150, 1
          %s764 = scalar_lea.vmem [#allocation10], %s763
          %765 = dma.done %s762, 16
        $region68: #{tpu_custom_call.1} parent=55 // pred_fallthru
          _
      $region56: #{tpu_custom_call.1} parent=5 // pred_fallthru
        _
    $region6: #{tpu_custom_call.1} parent=1 // loop_footer
      %s25 = sadd.s32 1, %s21
    $region7: #{tpu_custom_call.1} parent=1 // loop_footer_branch
      %20 = sbr.rel target = $region3
    $region8: #{tpu_custom_call.1} parent=1 // loop_exit
      _
    %766 = vsyncpa [#allocation3], 1
    %s767 = scalar_lea.sflag [#allocation3], 1
    %768 = vsyncpa %s767, 1
    %769 = vsyncpa [#allocation6], 1
    %770 = vsyncpa [#allocation4], 1
    %s771 = scalar_lea.sflag [#allocation4], 1
    %772 = vsyncpa %s771, 1
    %773 = vsyncpa [#allocation9], 1
    %s774 = scalar_lea.sflag [#allocation9], 1
    %775 = vsyncpa %s774, 1

</llo_original>
